<compile_context>
chip_gen: v6e
topology: v6e:2x2x1
jax: 0.10.0
libtpu: 0.0.40
codegen_flags: <defaults>
</compile_context>

<pallas_src>
import functools

import jax
import jax.numpy as jnp
from jax import lax
from jax.experimental import pallas as pl
from jax.experimental.pallas import tpu as pltpu

BN_EPS = 1e-5


def _round_up(x, m):
    return ((x + m - 1) // m) * m


def _pad2d(a, shape):
    return jnp.pad(a, [(0, s - d) for d, s in zip(a.shape, shape)])


def fasttext_head_kernel(x_ref, w1_ref, b1_ref, w2_ref, b2_ref, out_ref, *,
                         num_class):
    # fc[0] Linear (BatchNorm already folded into w1/b1)  ->  fc[2] ReLU
    h = jnp.dot(x_ref[...], w1_ref[...],
                preferred_element_type=jnp.float32) + b1_ref[...]
    h = jnp.maximum(h, 0.0)

    # fc[3] Linear(hidden, num_class)
    logits = jnp.dot(h.astype(w2_ref.dtype), w2_ref[...],
                     preferred_element_type=jnp.float32) + b2_ref[...]

    # Mask lane-padding columns so they don't corrupt the normalizer, then
    # log_softmax over the class axis (exp/log land on the otherwise-idle EUP).
    col = lax.broadcasted_iota(jnp.int32, logits.shape, 1)
    logits = jnp.where(col < num_class, logits, -jnp.inf)
    m = jnp.max(logits, axis=1, keepdims=True)
    z = logits - m
    lse = jnp.log(jnp.sum(jnp.exp(z), axis=1, keepdims=True))
    out_ref[...] = (z - lse).astype(out_ref.dtype)


def fasttext_forward(token_ids, embed_weight, params, *, batch_tile=128,
                     matmul_dtype=jnp.float32):
    """Eval-mode forward of the FastText `fc` path.

    token_ids: int32 [B, S]; embed_weight: f32 [num_word, D].
    params: w1 [D, H], b1/gamma/beta/rmean/rvar [1, H], w2 [H, C], b2 [1, C].
    (Linear weights stored as [in, out], i.e. transposed vs PyTorch.)
    """
    B, S = token_ids.shape
    D = embed_weight.shape[1]
    H = params["w1"].shape[1]
    C = params["w2"].shape[1]

    # ---- Gather + mean-pool (XLA-fused): only [B, D] reaches the kernel. ----
    emb = jnp.take(embed_weight, token_ids, axis=0).astype(jnp.float32)
    x = jnp.sum(emb, axis=1) * (1.0 / S)                         # [B, D]

    # ---- Fold eval-mode BatchNorm into the first Linear (trace time). ----
    scale = params["gamma"] * lax.rsqrt(params["rvar"] + BN_EPS)  # [1, H]
    w1_f = params["w1"] * scale                                   # [D, H]
    b1_f = (params["b1"] - params["rmean"]) * scale + params["beta"]

    # ---- Pad feature dims to 128 lanes; batch to a multiple of the tile. ----
    Dp, Hp, Cp = _round_up(D, 128), _round_up(H, 128), _round_up(C, 128)
    TB = min(batch_tile, _round_up(B, 8))        # multiple of 8 (sublane)
    grid_b = pl.cdiv(B, TB)
    Bp = grid_b * TB

    x_p = _pad2d(x, (Bp, Dp)).astype(matmul_dtype)
    w1_p = _pad2d(w1_f, (Dp, Hp)).astype(matmul_dtype)
    b1_p = _pad2d(b1_f, (1, Hp)).astype(jnp.float32)
    w2_p = _pad2d(params["w2"], (Hp, Cp)).astype(matmul_dtype)
    b2_p = _pad2d(params["b2"], (1, Cp)).astype(jnp.float32)

    kernel = functools.partial(fasttext_head_kernel, num_class=C)

    out_p = pl.pallas_call(
        kernel,
        out_shape=jax.ShapeDtypeStruct((Bp, Cp), jnp.float32),
        grid=(grid_b,),
        in_specs=[
            pl.BlockSpec((TB, Dp), lambda i: (i, 0)),   # activations: tiled on B
            pl.BlockSpec((Dp, Hp), lambda i: (0, 0)),   # weights stay resident
            pl.BlockSpec((1, Hp), lambda i: (0, 0)),
            pl.BlockSpec((Hp, Cp), lambda i: (0, 0)),
            pl.BlockSpec((1, Cp), lambda i: (0, 0)),
        ],
        out_specs=pl.BlockSpec((TB, Cp), lambda i: (i, 0)),
        compiler_params=pltpu.CompilerParams(
            dimension_semantics=("parallel",)),
    )(x_p, w1_p, b1_p, w2_p, b2_p)

    return out_p[:B, :C]


def fasttext_reference(token_ids, embed_weight, params):
    emb = jnp.take(embed_weight, token_ids, axis=0).astype(jnp.float32)
    x = jnp.mean(emb, axis=1)
    h = x @ params["w1"] + params["b1"]
    h = (h - params["rmean"]) / jnp.sqrt(params["rvar"] + BN_EPS)
    h = h * params["gamma"] + params["beta"]
    h = jnp.maximum(h, 0.0)
    logits = h @ params["w2"] + params["b2"]
    return jax.nn.log_softmax(logits, axis=1)


if __name__ == "__main__":
    # Small shapes consistent with the module's forward().
    B, S = 64, 16         # batch, sequence length
    NUM_WORD = 100        # vocab size for the pretrained embedding
    DIM = 32              # embedding dim
    HIDDEN = 32           # hidden_size
    NUM_CLASS = 8         # num_class

    key = jax.random.PRNGKey(0)
    keys = jax.random.split(key, 10)

    embed_weight = jax.random.normal(keys[0], (NUM_WORD, DIM), jnp.float32) * 0.1
    params = {
        "w1":    jax.random.normal(keys[1], (DIM, HIDDEN), jnp.float32) * 0.1,
        "b1":    jax.random.normal(keys[2], (1, HIDDEN), jnp.float32) * 0.1,
        "gamma": jax.random.uniform(keys[3], (1, HIDDEN), jnp.float32, 0.5, 1.5),
        "beta":  jax.random.normal(keys[4], (1, HIDDEN), jnp.float32) * 0.1,
        "rmean": jax.random.normal(keys[5], (1, HIDDEN), jnp.float32) * 0.1,
        "rvar":  jax.random.uniform(keys[6], (1, HIDDEN), jnp.float32, 0.5, 1.5),
        "w2":    jax.random.normal(keys[7], (HIDDEN, NUM_CLASS), jnp.float32) * 0.1,
        "b2":    jax.random.normal(keys[8], (1, NUM_CLASS), jnp.float32) * 0.1,
    }
    token_ids = jax.random.randint(keys[9], (B, S), 0, NUM_WORD, jnp.int32)

    # batch_tile=32 -> grid of 2 "parallel" steps (exercises pipelining / 2 TCs).
    out = fasttext_forward(token_ids, embed_weight, params, batch_tile=32)
    out = jax.block_until_ready(out)

    ref = fasttext_reference(token_ids, embed_weight, params)
    assert out.shape == (B, NUM_CLASS)
    assert jnp.allclose(out, ref, atol=1e-4, rtol=1e-4), "mismatch vs reference"

    print("KERNEL_OK")
</pallas_src>

<mosaic_0001>
module attributes {stable_mosaic.version = 11 : i64} {
  func.func @fasttext_head_kernel(%arg0: i32, %arg1: memref<32x128xf32, #tpu.memory_space<vmem>>, %arg2: memref<128x128xf32, #tpu.memory_space<vmem>>, %arg3: memref<1x128xf32, #tpu.memory_space<vmem>>, %arg4: memref<128x128xf32, #tpu.memory_space<vmem>>, %arg5: memref<1x128xf32, #tpu.memory_space<vmem>>, %arg6: memref<32x128xf32, #tpu.memory_space<vmem>>) attributes {dimension_semantics = [#tpu.dimension_semantics<parallel>], iteration_bounds = array<i64: 2>, scalar_prefetch = 0 : i64, scratch_operands = 0 : i64, tpu.core_type = #tpu.core_type<tc>, window_params = [{transform_indices = @transform_0, window_bounds = array<i64: 32, 128>}, {pipeline_mode = #tpu.pipeline_mode<synchronous>, transform_indices = @transform_1, window_bounds = array<i64: 128, 128>}, {pipeline_mode = #tpu.pipeline_mode<synchronous>, transform_indices = @transform_2, window_bounds = array<i64: 1, 128>}, {pipeline_mode = #tpu.pipeline_mode<synchronous>, transform_indices = @transform_3, window_bounds = array<i64: 128, 128>}, {pipeline_mode = #tpu.pipeline_mode<synchronous>, transform_indices = @transform_4, window_bounds = array<i64: 1, 128>}, {transform_indices = @transform_5, window_bounds = array<i64: 32, 128>}]} {
    %c0 = arith.constant 0 : index
    %c0_0 = arith.constant 0 : index
    %0 = vector.load %arg1[%c0, %c0_0] : memref<32x128xf32, #tpu.memory_space<vmem>>, vector<32x128xf32>
    %c0_1 = arith.constant 0 : index
    %c0_2 = arith.constant 0 : index
    %1 = vector.load %arg2[%c0_1, %c0_2] : memref<128x128xf32, #tpu.memory_space<vmem>>, vector<128x128xf32>
    %cst = arith.constant dense<0.000000e+00> : vector<32x128xf32>
    %2 = tpu.matmul %0, %1, %cst {dimension_numbers = #tpu.dot_dimension_numbers<[1], [0], [0], [1], [0, 0, 1, 1], [], []>} : vector<32x128xf32>, vector<128x128xf32>, vector<32x128xf32> -> vector<32x128xf32>
    %c0_3 = arith.constant 0 : index
    %c0_4 = arith.constant 0 : index
    %3 = vector.load %arg3[%c0_3, %c0_4] : memref<1x128xf32, #tpu.memory_space<vmem>>, vector<1x128xf32>
    %4 = vector.broadcast %3 : vector<1x128xf32> to vector<32x128xf32>
    %5 = arith.addf %2, %4 : vector<32x128xf32>
    %cst_5 = arith.constant 0.000000e+00 : f32
    %6 = vector.broadcast %cst_5 : f32 to vector<32x128xf32>
    %7 = arith.maximumf %5, %6 : vector<32x128xf32>
    %c0_6 = arith.constant 0 : index
    %c0_7 = arith.constant 0 : index
    %8 = vector.load %arg4[%c0_6, %c0_7] : memref<128x128xf32, #tpu.memory_space<vmem>>, vector<128x128xf32>
    %cst_8 = arith.constant dense<0.000000e+00> : vector<32x128xf32>
    %9 = tpu.matmul %7, %8, %cst_8 {dimension_numbers = #tpu.dot_dimension_numbers<[1], [0], [0], [1], [0, 0, 1, 1], [], []>} : vector<32x128xf32>, vector<128x128xf32>, vector<32x128xf32> -> vector<32x128xf32>
    %c0_9 = arith.constant 0 : index
    %c0_10 = arith.constant 0 : index
    %10 = vector.load %arg5[%c0_9, %c0_10] : memref<1x128xf32, #tpu.memory_space<vmem>>, vector<1x128xf32>
    %11 = vector.broadcast %10 : vector<1x128xf32> to vector<32x128xf32>
    %12 = arith.addf %9, %11 : vector<32x128xf32>
    %13 = tpu.iota {dimensions = array<i32: 1>} : vector<32x128xi32>
    %c8_i32 = arith.constant 8 : i32
    %14 = vector.broadcast %c8_i32 : i32 to vector<32x128xi32>
    %15 = arith.cmpi slt, %13, %14 : vector<32x128xi32>
    %cst_11 = arith.constant 0xFF800000 : f32
    %16 = vector.broadcast %cst_11 : f32 to vector<32x128xf32>
    %17 = arith.select %15, %12, %16 : vector<32x128xi1>, vector<32x128xf32>
    %cst_12 = arith.constant dense<0xFF800000> : vector<32xf32>
    %18 = vector.multi_reduction <maximumf>, %17, %cst_12 [1] : vector<32x128xf32> to vector<32xf32>
    %19 = vector.shape_cast %18 : vector<32xf32> to vector<32x1xf32>
    %20 = vector.broadcast %19 : vector<32x1xf32> to vector<32x128xf32>
    %21 = arith.subf %17, %20 : vector<32x128xf32>
    %22 = math.exp %21 : vector<32x128xf32>
    %cst_13 = arith.constant dense<0.000000e+00> : vector<32xf32>
    %23 = vector.multi_reduction <add>, %22, %cst_13 [1] : vector<32x128xf32> to vector<32xf32>
    %24 = vector.shape_cast %23 : vector<32xf32> to vector<32x1xf32>
    %25 = math.log %24 : vector<32x1xf32>
    %26 = vector.broadcast %25 : vector<32x1xf32> to vector<32x128xf32>
    %27 = arith.subf %21, %26 : vector<32x128xf32>
    %c0_14 = arith.constant 0 : index
    %c0_15 = arith.constant 0 : index
    %28 = vector.load %arg6[%c0_14, %c0_15] : memref<32x128xf32, #tpu.memory_space<vmem>>, vector<32x128xf32>
    tpu.vector_store %arg6[%c0_14, %c0_15], %27 {strides = array<i32>} : memref<32x128xf32, #tpu.memory_space<vmem>>, vector<32x128xf32>,
    return
  }
  func.func @transform_0(%arg0: i32) -> (i32, i32) {
    %c0_i32 = arith.constant 0 : i32
    %c0_i32_0 = arith.constant 0 : i32
    return %arg0, %c0_i32 : i32, i32
  }
  func.func @transform_1(%arg0: i32) -> (i32, i32) {
    %c0_i32 = arith.constant 0 : i32
    %c0_i32_0 = arith.constant 0 : i32
    %c0_i32_1 = arith.constant 0 : i32
    return %c0_i32, %c0_i32_0 : i32, i32
  }
  func.func @transform_2(%arg0: i32) -> (i32, i32) {
    %c0_i32 = arith.constant 0 : i32
    %c0_i32_0 = arith.constant 0 : i32
    %c0_i32_1 = arith.constant 0 : i32
    return %c0_i32, %c0_i32_0 : i32, i32
  }
  func.func @transform_3(%arg0: i32) -> (i32, i32) {
    %c0_i32 = arith.constant 0 : i32
    %c0_i32_0 = arith.constant 0 : i32
    %c0_i32_1 = arith.constant 0 : i32
    return %c0_i32, %c0_i32_0 : i32, i32
  }
  func.func @transform_4(%arg0: i32) -> (i32, i32) {
    %c0_i32 = arith.constant 0 : i32
    %c0_i32_0 = arith.constant 0 : i32
    %c0_i32_1 = arith.constant 0 : i32
    return %c0_i32, %c0_i32_0 : i32, i32
  }
  func.func @transform_5(%arg0: i32) -> (i32, i32) {
    %c0_i32 = arith.constant 0 : i32
    %c0_i32_0 = arith.constant 0 : i32
    return %arg0, %c0_i32 : i32, i32
  }
}

</mosaic_0001>

<llo_original>
// kernel: tpu_custom_call.1
$region0: #{tpu_custom_call.1}
  #allocation0 [shape = 'u32[]', space=smem, size = 0x4, offset = 0x4, fixed_abs, tag = 'smem constant byte address 0x4 - core index']
  #allocation1 [shape = 'u32[144,128]{1,0:T(1,128)}', space=vmem, size = 0x12000, scoped, tag = 'internal scratch']
  %s0 = inlined_call_operand.hbm [shape: f32[64,128], index: 0, kind: input, shape index: {}]
  %s1 = inlined_call_operand.hbm [shape: f32[128,128], index: 1, kind: input, shape index: {}]
  %s2 = inlined_call_operand.vmem [shape: f32[1,128], index: 2, kind: input, shape index: {}]
  %s3 = inlined_call_operand.hbm [shape: f32[128,128], index: 3, kind: input, shape index: {}]
  %s4 = inlined_call_operand.vmem [shape: f32[1,128], index: 4, kind: input, shape index: {}]
  %s5 = inlined_call_operand.hbm [shape: f32[64,128], index: 5, kind: output, shape index: {}]
  %s6 = sld [smem:[#allocation0]]
  $region65: #{tpu_custom_call.1} parent=0
    _
  %s8 = ssub.s32 1, %s6
  %s9 = scalar_select 0, %s8, %s6
  $region1: #{tpu_custom_call.1} parent=0
    #allocation2 [shape = 'u8[32768]{0}', space=vmem, size = 0x8000, scoped, tag = 'input window, operand 0']
    #allocation3 [shape = 's32[2]{0}', space=sflag, size = 0x8, scoped, tag = 'scoped memory for tpu_custom_call.1']
    #allocation4 [shape = 's32[2]{0}', space=sflag, size = 0x8, scoped, tag = 'scoped memory for tpu_custom_call.1']
    #allocation5 [shape = 'u8[65536]{0}', space=vmem, size = 0x10000, scoped, tag = 'input window, operand 1, single buffered']
    #allocation6 [shape = 's32[1]{0}', space=sflag, size = 0x4, scoped, tag = 'scoped memory for tpu_custom_call.1']
    #allocation7 [shape = 'u8[65536]{0}', space=vmem, size = 0x10000, scoped, tag = 'input window, operand 3, single buffered']
    #allocation8 [shape = 'u8[32768]{0}', space=vmem, size = 0x8000, scoped, tag = 'output window, operand 0']
    %10 = vsyncpa [#allocation3], 0
    %s11 = scalar_lea.sflag [#allocation3], 1
    %12 = vsyncpa %s11, 0
    %13 = vsyncpa [#allocation6], 0
    %14 = vsyncpa [#allocation4], 0
    %s15 = scalar_lea.sflag [#allocation4], 1
    %16 = vsyncpa %s15, 0
    loop: start=0, step=1, limit=4
    $region2: #{tpu_custom_call.1} parent=1 // loop_pre_header
      _
    $region3: #{tpu_custom_call.1} parent=1 // loop_header
      %s18 = sphi 0, %s22
      %p19 = scmp.ge.s32.totalorder %s18, 4
      %s28 = sphi 0, %s30
      %s31 = sphi 0, %s28
      %s32 = sphi 0, %s31
      %s48 = sphi 0, %s32
      %s52 = sphi 0, %s52
      %s54 = sphi 0, %s52
      %s55 = sphi 0, %s54
      %s69 = sphi 0, %s55
      %s73 = sphi 0, %s73
      %s75 = sphi 0, %s73
      %s76 = sphi 0, %s75
      %s90 = sphi 0, %s76
      %s94 = sphi 0, %s94
      %s96 = sphi 0, %s94
      %s97 = sphi 0, %s96
      %s111 = sphi 0, %s97
      %s115 = sphi 0, %s115
      %s117 = sphi 0, %s115
      %s118 = sphi 0, %s117
      %s132 = sphi 0, %s118
      %s138 = sphi 0, %s140
      %s141 = sphi 0, %s138
      %s142 = sphi 0, %s141
      %s158 = sphi 0, %s142
    $region4: #{tpu_custom_call.1} parent=1 // loop_header_branch
      %21 = sbr.rel (%p19) target = $region8
    $region5: #{tpu_custom_call.1} parent=1 // loop_body
      %s23 = ssub.s32 %s18, 1
      %s24 = ssub.s32 %s18, 2
      %s25 = sadd.s32 %s18, 1
      %s26 = ssub.s32 %s18, %s25
      %p27 = scmp.eq.s32.totalorder %s26, 0
      %s29 = sadd.s32 %s28, 1
      %s30 = scalar_select %p27, %s28, %s29
      %p33 = pneg %p27
      %p34 = scmp.eq.s32.totalorder %s18, 1
      %p35 = por %p33, %p34
      %p36 = scmp.ne.s32.totalorder %s28, %s31
      %p37 = scmp.eq.s32.totalorder %s18, 0
      %p38 = por %p36, %p37
      %p39 = scmp.ne.s32.totalorder %s28, %s31
      %p40 = scmp.eq.s32.totalorder %s23, 1
      %p41 = por %p39, %p40
      %p42 = scmp.ne.s32.totalorder %s31, %s32
      %p43 = scmp.eq.s32.totalorder %s23, 0
      %p44 = por %p42, %p43
      %p45 = scmp.ne.s32.totalorder %s31, %s32
      %p46 = scmp.eq.s32.totalorder %s24, 1
      %p47 = por %p45, %p46
      %p49 = scmp.ne.s32.totalorder %s32, %s48
      %p50 = scmp.eq.s32.totalorder %s24, 0
      %p51 = por %p49, %p50
      %s53 = sadd.s32 %s52, 1
      %p56 = scmp.eq.s32.totalorder %s18, 1
      %p57 = scmp.ne.s32.totalorder %s52, %s54
      %p58 = scmp.eq.s32.totalorder %s18, 0
      %p59 = por %p57, %p58
      %p60 = scmp.ne.s32.totalorder %s52, %s54
      %p61 = scmp.eq.s32.totalorder %s23, 1
      %p62 = por %p60, %p61
      %p63 = scmp.ne.s32.totalorder %s54, %s55
      %p64 = scmp.eq.s32.totalorder %s23, 0
      %p65 = por %p63, %p64
      %p66 = scmp.ne.s32.totalorder %s54, %s55
      %p67 = scmp.eq.s32.totalorder %s24, 1
      %p68 = por %p66, %p67
      %p70 = scmp.ne.s32.totalorder %s55, %s69
      %p71 = scmp.eq.s32.totalorder %s24, 0
      %p72 = por %p70, %p71
      %s74 = sadd.s32 %s73, 1
      %p77 = scmp.eq.s32.totalorder %s18, 1
      %p78 = scmp.ne.s32.totalorder %s73, %s75
      %p79 = scmp.eq.s32.totalorder %s18, 0
      %p80 = por %p78, %p79
      %p81 = scmp.ne.s32.totalorder %s73, %s75
      %p82 = scmp.eq.s32.totalorder %s23, 1
      %p83 = por %p81, %p82
      %p84 = scmp.ne.s32.totalorder %s75, %s76
      %p85 = scmp.eq.s32.totalorder %s23, 0
      %p86 = por %p84, %p85
      %p87 = scmp.ne.s32.totalorder %s75, %s76
      %p88 = scmp.eq.s32.totalorder %s24, 1
      %p89 = por %p87, %p88
      %p91 = scmp.ne.s32.totalorder %s76, %s90
      %p92 = scmp.eq.s32.totalorder %s24, 0
      %p93 = por %p91, %p92
      %s95 = sadd.s32 %s94, 1
      %p98 = scmp.eq.s32.totalorder %s18, 1
      %p99 = scmp.ne.s32.totalorder %s94, %s96
      %p100 = scmp.eq.s32.totalorder %s18, 0
      %p101 = por %p99, %p100
      %p102 = scmp.ne.s32.totalorder %s94, %s96
      %p103 = scmp.eq.s32.totalorder %s23, 1
      %p104 = por %p102, %p103
      %p105 = scmp.ne.s32.totalorder %s96, %s97
      %p106 = scmp.eq.s32.totalorder %s23, 0
      %p107 = por %p105, %p106
      %p108 = scmp.ne.s32.totalorder %s96, %s97
      %p109 = scmp.eq.s32.totalorder %s24, 1
      %p110 = por %p108, %p109
      %p112 = scmp.ne.s32.totalorder %s97, %s111
      %p113 = scmp.eq.s32.totalorder %s24, 0
      %p114 = por %p112, %p113
      %s116 = sadd.s32 %s115, 1
      %p119 = scmp.eq.s32.totalorder %s18, 1
      %p120 = scmp.ne.s32.totalorder %s115, %s117
      %p121 = scmp.eq.s32.totalorder %s18, 0
      %p122 = por %p120, %p121
      %p123 = scmp.ne.s32.totalorder %s115, %s117
      %p124 = scmp.eq.s32.totalorder %s23, 1
      %p125 = por %p123, %p124
      %p126 = scmp.ne.s32.totalorder %s117, %s118
      %p127 = scmp.eq.s32.totalorder %s23, 0
      %p128 = por %p126, %p127
      %p129 = scmp.ne.s32.totalorder %s117, %s118
      %p130 = scmp.eq.s32.totalorder %s24, 1
      %p131 = por %p129, %p130
      %p133 = scmp.ne.s32.totalorder %s118, %s132
      %p134 = scmp.eq.s32.totalorder %s24, 0
      %p135 = por %p133, %p134
      %s136 = ssub.s32 %s18, %s25
      %p137 = scmp.eq.s32.totalorder %s136, 0
      %s139 = sadd.s32 %s138, 1
      %s140 = scalar_select %p137, %s138, %s139
      %p143 = pneg %p137
      %p144 = scmp.eq.s32.totalorder %s18, 1
      %p145 = por %p143, %p144
      %p146 = scmp.ne.s32.totalorder %s138, %s141
      %p147 = scmp.eq.s32.totalorder %s18, 0
      %p148 = por %p146, %p147
      %p149 = scmp.ne.s32.totalorder %s138, %s141
      %p150 = scmp.eq.s32.totalorder %s23, 1
      %p151 = por %p149, %p150
      %p152 = scmp.ne.s32.totalorder %s141, %s142
      %p153 = scmp.eq.s32.totalorder %s23, 0
      %p154 = por %p152, %p153
      %p155 = scmp.ne.s32.totalorder %s141, %s142
      %p156 = scmp.eq.s32.totalorder %s24, 1
      %p157 = por %p155, %p156
      %p159 = scmp.ne.s32.totalorder %s142, %s158
      %p160 = scmp.eq.s32.totalorder %s24, 0
      %p161 = por %p159, %p160
      %p162 = scmp.le.s32.totalorder 1, %s18
      %p163 = scmp.lt.s32.totalorder %s18, 3
      %p164 = pnand %p162, %p163
      %p165 = pneg %p164
      // Predicated region
      $region9: #{tpu_custom_call.1} parent=5 // pred_check
        _
      $region10: #{tpu_custom_call.1} parent=5 // pred_check_branch
        %167 = sbr.rel (%p164) target = $region12
      $region11: #{tpu_custom_call.1} parent=5 // pred_region
        %s168 = ssub.s32 %s18, 1
        // Predicated region
        $region13: #{tpu_custom_call.1} parent=11 // pred_check
          %p169 = pneg %p65
        $region14: #{tpu_custom_call.1} parent=11 // pred_check_branch
          %171 = sbr.rel (%p169) target = $region16
        $region15: #{tpu_custom_call.1} parent=11 // pred_region
          %s173 = ssub.s32 2048, 2048
          %174 = vsyncadd [#allocation6], %s173
          %s175 = sshll.u32 [#allocation5], 4
          %s176 = int_to_ptr.vmem [resolvable:$true] %s175
          %181 = dma.hbm_to_vmem [thread:$0]  %s1, 2048, %s176, [#allocation6], 128, 128, 8
        $region16: #{tpu_custom_call.1} parent=11 // pred_fallthru
          _
        // Predicated region
        $region17: #{tpu_custom_call.1} parent=11 // pred_check
          %p182 = pneg %p86
        $region18: #{tpu_custom_call.1} parent=11 // pred_check_branch
          %184 = sbr.rel (%p182) target = $region20
        $region19: #{tpu_custom_call.1} parent=11 // pred_region
          _
        $region20: #{tpu_custom_call.1} parent=11 // pred_fallthru
          _
        // Predicated region
        $region21: #{tpu_custom_call.1} parent=11 // pred_check
          %p185 = pneg %p107
        $region22: #{tpu_custom_call.1} parent=11 // pred_check_branch
          %187 = sbr.rel (%p185) target = $region24
        $region23: #{tpu_custom_call.1} parent=11 // pred_region
          %s189 = ssub.s32 2048, 2048
          %190 = vsyncadd [#allocation6], %s189
          %s191 = sshll.u32 [#allocation7], 4
          %s192 = int_to_ptr.vmem [resolvable:$true] %s191
          %197 = dma.hbm_to_vmem [thread:$0]  %s3, 2048, %s192, [#allocation6], 128, 128, 8
        $region24: #{tpu_custom_call.1} parent=11 // pred_fallthru
          _
        // Predicated region
        $region25: #{tpu_custom_call.1} parent=11 // pred_check
          %p198 = pneg %p128
        $region26: #{tpu_custom_call.1} parent=11 // pred_check_branch
          %200 = sbr.rel (%p198) target = $region28
        $region27: #{tpu_custom_call.1} parent=11 // pred_region
          _
        $region28: #{tpu_custom_call.1} parent=11 // pred_fallthru
          _
      $region12: #{tpu_custom_call.1} parent=5 // pred_fallthru
        _
      %p201 = scmp.lt.s32.totalorder %s18, 2
      // Predicated region
      $region29: #{tpu_custom_call.1} parent=5 // pred_check
        %p202 = pneg %p201
      $region30: #{tpu_custom_call.1} parent=5 // pred_check_branch
        %204 = sbr.rel (%p202) target = $region32
      $region31: #{tpu_custom_call.1} parent=5 // pred_region
        // Predicated region
        $region33: #{tpu_custom_call.1} parent=31 // pred_check
          %p205 = pneg %p38
        $region34: #{tpu_custom_call.1} parent=31 // pred_check_branch
          %207 = sbr.rel (%p205) target = $region36
        $region35: #{tpu_custom_call.1} parent=31 // pred_region
          %s208 = sand.u32 %s28, 1
          %s209 = scalar_lea.sflag [#allocation3], %s208
          %s210 = sand.u32 %s28, 1
          %s211 = smul.addr %s210, 32
          %s212 = scalar_lea.vmem [#allocation2], %s211
          %s213 = smul.u32 4, %s18
          %s215 = ssub.s32 512, 512
          %216 = vsyncadd %s209, %s215
          %s217 = smul.addr %s213, 128
          %s218 = scalar_lea.hbm %s0, %s217
          %s219 = sshll.u32 %s212, 4
          %s220 = int_to_ptr.vmem [resolvable:$true] %s219
          %225 = dma.hbm_to_vmem [thread:$0]  %s218, 512, %s220, %s209, 128, 128, 8
        $region36: #{tpu_custom_call.1} parent=31 // pred_fallthru
          _
      $region32: #{tpu_custom_call.1} parent=5 // pred_fallthru
        _
      %p226 = scmp.le.s32.totalorder 1, %s18
      %p227 = scmp.lt.s32.totalorder %s18, 3
      %p228 = pnand %p226, %p227
      %p229 = pneg %p228
      // Predicated region
      $region37: #{tpu_custom_call.1} parent=5 // pred_check
        _
      $region38: #{tpu_custom_call.1} parent=5 // pred_check_branch
        %231 = sbr.rel (%p228) target = $region40
      $region39: #{tpu_custom_call.1} parent=5 // pred_region
        %s232 = ssub.s32 %s18, 1
        %s233 = sand.u32 %s31, 1
        %s234 = scalar_lea.sflag [#allocation3], %s233
        %s235 = sand.u32 %s31, 1
        %s236 = smul.addr %s235, 32
        %s237 = scalar_lea.vmem [#allocation2], %s236
        // Predicated region
        $region41: #{tpu_custom_call.1} parent=39 // pred_check
          %p238 = pneg %p44
        $region42: #{tpu_custom_call.1} parent=39 // pred_check_branch
          %240 = sbr.rel (%p238) target = $region44
        $region43: #{tpu_custom_call.1} parent=39 // pred_region
          %241 = dma.done %s234, 512
        $region44: #{tpu_custom_call.1} parent=39 // pred_fallthru
          _
        // Predicated region
        $region45: #{tpu_custom_call.1} parent=39 // pred_check
          %p242 = pneg %p65
        $region46: #{tpu_custom_call.1} parent=39 // pred_check_branch
          %244 = sbr.rel (%p242) target = $region48
        $region47: #{tpu_custom_call.1} parent=39 // pred_region
          %245 = dma.done [#allocation6], 2048
        $region48: #{tpu_custom_call.1} parent=39 // pred_fallthru
          _
        // Predicated region
        $region49: #{tpu_custom_call.1} parent=39 // pred_check
          %p246 = pneg %p107
        $region50: #{tpu_custom_call.1} parent=39 // pred_check_branch
          %248 = sbr.rel (%p246) target = $region52
        $region51: #{tpu_custom_call.1} parent=39 // pred_region
          %249 = dma.done [#allocation6], 2048
        $region52: #{tpu_custom_call.1} parent=39 // pred_fallthru
          _
        %s250 = sand.u32 %s31, 1
        %s251 = scalar_lea.sflag [#allocation3], %s250
        %s252 = sand.u32 %s31, 1
        %s253 = smul.addr %s252, 32
        %s254 = scalar_lea.vmem [#allocation2], %s253
        %p255 = pneg %p44
        %p256 = pneg %p41
        %p257 = pneg %p65
        %p258 = pneg %p62
        %p259 = pneg %p86
        %p260 = pneg %p83
        %p261 = pneg %p107
        %p262 = pneg %p104
        %p263 = pneg %p128
        %p264 = pneg %p125
        %p265 = pneg %p154
        %p266 = pneg %p151
        %s267 = sand.u32 %s141, 1
        %s268 = scalar_lea.sflag [#allocation4], %s267
        %s269 = sand.u32 %s141, 1
        %s270 = smul.addr %s269, 32
        %s271 = scalar_lea.vmem [#allocation8], %s270
        %s272 = smul.u32 4, %s23
        %s273 = smul.u32 4, %s23
        %v274 = vld [vmem:[%s237] sm:$0xff]
        %v275 = vld [vmem:[%s237 + $0x8] sm:$0xff]
        %v276 = vld [vmem:[%s237 + $0x10] sm:$0xff]
        %v277 = vld [vmem:[%s237 + $0x18] sm:$0xff]
        %v278 = vld [vmem:[#allocation5] sm:$0xff]
        %v279 = vld [vmem:[#allocation5 + $0x8] sm:$0xff]
        %v280 = vld [vmem:[#allocation5 + $0x10] sm:$0xff]
        %v281 = vld [vmem:[#allocation5 + $0x18] sm:$0xff]
        %v282 = vld [vmem:[#allocation5 + $0x20] sm:$0xff]
        %v283 = vld [vmem:[#allocation5 + $0x28] sm:$0xff]
        %v284 = vld [vmem:[#allocation5 + $0x30] sm:$0xff]
        %v285 = vld [vmem:[#allocation5 + $0x38] sm:$0xff]
        %v286 = vld [vmem:[#allocation5 + $0x40] sm:$0xff]
        %v287 = vld [vmem:[#allocation5 + $0x48] sm:$0xff]
        %v288 = vld [vmem:[#allocation5 + $0x50] sm:$0xff]
        %v289 = vld [vmem:[#allocation5 + $0x58] sm:$0xff]
        %v290 = vld [vmem:[#allocation5 + $0x60] sm:$0xff]
        %v291 = vld [vmem:[#allocation5 + $0x68] sm:$0xff]
        %v292 = vld [vmem:[#allocation5 + $0x70] sm:$0xff]
        %v293 = vld [vmem:[#allocation5 + $0x78] sm:$0xff]
        %v294 = vld [vmem:[%s2] sm:$0x1]
        %v296 = vlaneseq
        %v297 = vshrl.u32 %v296, 7
        %v298 = vsub.s32 0, %v297
        %v299 = vrot.slane %v294, %v298
        %301 = vmatprep.subr.mxu0 0.0
        %302 = vmatpush1.msra.mxu0 %v293
        %303 = vmatprep.subr.mxu0 0.0
        %304 = vmatpush1.msra.mxu0 %v292
        %305 = vmatprep.subr.mxu0 0.0
        %306 = vmatpush1.msra.mxu0 %v291
        %307 = vmatprep.subr.mxu0 0.0
        %308 = vmatpush1.msra.mxu0 %v290
        %309 = vmatprep.subr.mxu0 0.0
        %310 = vmatpush1.msra.mxu0 %v289
        %311 = vmatprep.subr.mxu0 0.0
        %312 = vmatpush1.msra.mxu0 %v288
        %313 = vmatprep.subr.mxu0 0.0
        %314 = vmatpush1.msra.mxu0 %v287
        %315 = vmatprep.subr.mxu0 0.0
        %316 = vmatpush1.msra.mxu0 %v286
        %317 = vmatprep.subr.mxu0 0.0
        %318 = vmatpush1.msra.mxu0 %v285
        %319 = vmatprep.subr.mxu0 0.0
        %320 = vmatpush1.msra.mxu0 %v284
        %321 = vmatprep.subr.mxu0 0.0
        %322 = vmatpush1.msra.mxu0 %v283
        %323 = vmatprep.subr.mxu0 0.0
        %324 = vmatpush1.msra.mxu0 %v282
        %325 = vmatprep.subr.mxu0 0.0
        %326 = vmatpush1.msra.mxu0 %v281
        %327 = vmatprep.subr.mxu0 0.0
        %328 = vmatpush1.msra.mxu0 %v280
        %329 = vmatprep.subr.mxu0 0.0
        %330 = vmatpush1.msra.mxu0 %v279
        %331 = vmatprep.subr.mxu0 0.0
        %332 = vmatpush1.msra.mxu0 %v278
        %333 = vmatprep.subr.mxu0 0.0
        %334 = vmatpush2.msra.mxu0 0.0
        %335 = vmatprep.subr.mxu0 0.0
        %336 = vmatpush2.msra.mxu0 0.0
        %337 = vmatprep.subr.mxu0 0.0
        %338 = vmatpush2.msra.mxu0 0.0
        %339 = vmatprep.subr.mxu0 0.0
        %340 = vmatpush2.msra.mxu0 0.0
        %341 = vmatprep.subr.mxu0 0.0
        %342 = vmatpush2.msra.mxu0 0.0
        %343 = vmatprep.subr.mxu0 0.0
        %344 = vmatpush2.msra.mxu0 0.0
        %345 = vmatprep.subr.mxu0 0.0
        %346 = vmatpush2.msra.mxu0 0.0
        %347 = vmatprep.subr.mxu0 0.0
        %348 = vmatpush2.msra.mxu0 0.0
        %349 = vmatprep.subr.mxu0 0.0
        %350 = vmatpush2.msra.mxu0 0.0
        %351 = vmatprep.subr.mxu0 0.0
        %352 = vmatpush2.msra.mxu0 0.0
        %353 = vmatprep.subr.mxu0 0.0
        %354 = vmatpush2.msra.mxu0 0.0
        %355 = vmatprep.subr.mxu0 0.0
        %356 = vmatpush2.msra.mxu0 0.0
        %357 = vmatprep.subr.mxu0 0.0
        %358 = vmatpush2.msra.mxu0 0.0
        %359 = vmatprep.subr.mxu0 0.0
        %360 = vmatpush2.msra.mxu0 0.0
        %361 = vmatprep.subr.mxu0 0.0
        %362 = vmatpush2.msra.mxu0 0.0
        %363 = vmatprep.subr.mxu0 0.0
        %364 = vmatpush2.msra.mxu0 0.0
        %365 = vmatprep.mubr.f32.mxu0 0.0
        %366 = vmatmul.mubr.f32.gmra.mxu0 %v274
        %v367 = vpop.f32.mrf.mxu0
        %v368 = vadd.f32 %v299, %v367
        %v369 = vpop.f32.mrf.mxu0
        %370 = vmatprep.mubr.f32.mxu0 0.0
        %371 = vmatmul.mubr.f32.gmra.mxu0 %v275
        %v372 = vpop.f32.mrf.mxu0
        %v373 = vadd.f32 %v299, %v372
        %v374 = vpop.f32.mrf.mxu0
        %375 = vmatprep.mubr.f32.mxu0 0.0
        %376 = vmatmul.mubr.f32.gmra.mxu0 %v276
        %v377 = vpop.f32.mrf.mxu0
        %v378 = vadd.f32 %v299, %v377
        %v379 = vpop.f32.mrf.mxu0
        %380 = vmatprep.mubr.f32.mxu0 0.0
        %381 = vmatmul.mubr.f32.gmra.mxu0 %v277
        %v382 = vpop.f32.mrf.mxu0
        %v383 = vadd.f32 %v299, %v382
        %v384 = vpop.f32.mrf.mxu0
        %385 = vdwg.mxu0
        %v386 = vmax.f32 %v368, 0.0
        %v387 = vmax.f32 %v373, 0.0
        %v388 = vmax.f32 %v378, 0.0
        %v389 = vmax.f32 %v383, 0.0
        %v390 = vld [vmem:[#allocation7] sm:$0xff]
        %v391 = vld [vmem:[#allocation7 + $0x8] sm:$0xff]
        %v392 = vld [vmem:[#allocation7 + $0x10] sm:$0xff]
        %v393 = vld [vmem:[#allocation7 + $0x18] sm:$0xff]
        %v394 = vld [vmem:[#allocation7 + $0x20] sm:$0xff]
        %v395 = vld [vmem:[#allocation7 + $0x28] sm:$0xff]
        %v396 = vld [vmem:[#allocation7 + $0x30] sm:$0xff]
        %v397 = vld [vmem:[#allocation7 + $0x38] sm:$0xff]
        %v398 = vld [vmem:[#allocation7 + $0x40] sm:$0xff]
        %v399 = vld [vmem:[#allocation7 + $0x48] sm:$0xff]
        %v400 = vld [vmem:[#allocation7 + $0x50] sm:$0xff]
        %v401 = vld [vmem:[#allocation7 + $0x58] sm:$0xff]
        %v402 = vld [vmem:[#allocation7 + $0x60] sm:$0xff]
        %v403 = vld [vmem:[#allocation7 + $0x68] sm:$0xff]
        %v404 = vld [vmem:[#allocation7 + $0x70] sm:$0xff]
        %v405 = vld [vmem:[#allocation7 + $0x78] sm:$0xff]
        %v406 = vld [vmem:[%s4] sm:$0x1]
        %v408 = vlaneseq
        %v409 = vshrl.u32 %v408, 7
        %v410 = vsub.s32 0, %v409
        %v411 = vrot.slane %v406, %v410
        %413 = vmatprep.subr.mxu0 0.0
        %414 = vmatpush1.msra.mxu0 %v405
        %415 = vmatprep.subr.mxu0 0.0
        %416 = vmatpush1.msra.mxu0 %v404
        %417 = vmatprep.subr.mxu0 0.0
        %418 = vmatpush1.msra.mxu0 %v403
        %419 = vmatprep.subr.mxu0 0.0
        %420 = vmatpush1.msra.mxu0 %v402
        %421 = vmatprep.subr.mxu0 0.0
        %422 = vmatpush1.msra.mxu0 %v401
        %423 = vmatprep.subr.mxu0 0.0
        %424 = vmatpush1.msra.mxu0 %v400
        %425 = vmatprep.subr.mxu0 0.0
        %426 = vmatpush1.msra.mxu0 %v399
        %427 = vmatprep.subr.mxu0 0.0
        %428 = vmatpush1.msra.mxu0 %v398
        %429 = vmatprep.subr.mxu0 0.0
        %430 = vmatpush1.msra.mxu0 %v397
        %431 = vmatprep.subr.mxu0 0.0
        %432 = vmatpush1.msra.mxu0 %v396
        %433 = vmatprep.subr.mxu0 0.0
        %434 = vmatpush1.msra.mxu0 %v395
        %435 = vmatprep.subr.mxu0 0.0
        %436 = vmatpush1.msra.mxu0 %v394
        %437 = vmatprep.subr.mxu0 0.0
        %438 = vmatpush1.msra.mxu0 %v393
        %439 = vmatprep.subr.mxu0 0.0
        %440 = vmatpush1.msra.mxu0 %v392
        %441 = vmatprep.subr.mxu0 0.0
        %442 = vmatpush1.msra.mxu0 %v391
        %443 = vmatprep.subr.mxu0 0.0
        %444 = vmatpush1.msra.mxu0 %v390
        %445 = vmatprep.subr.mxu0 0.0
        %446 = vmatpush2.msra.mxu0 0.0
        %447 = vmatprep.subr.mxu0 0.0
        %448 = vmatpush2.msra.mxu0 0.0
        %449 = vmatprep.subr.mxu0 0.0
        %450 = vmatpush2.msra.mxu0 0.0
        %451 = vmatprep.subr.mxu0 0.0
        %452 = vmatpush2.msra.mxu0 0.0
        %453 = vmatprep.subr.mxu0 0.0
        %454 = vmatpush2.msra.mxu0 0.0
        %455 = vmatprep.subr.mxu0 0.0
        %456 = vmatpush2.msra.mxu0 0.0
        %457 = vmatprep.subr.mxu0 0.0
        %458 = vmatpush2.msra.mxu0 0.0
        %459 = vmatprep.subr.mxu0 0.0
        %460 = vmatpush2.msra.mxu0 0.0
        %461 = vmatprep.subr.mxu0 0.0
        %462 = vmatpush2.msra.mxu0 0.0
        %463 = vmatprep.subr.mxu0 0.0
        %464 = vmatpush2.msra.mxu0 0.0
        %465 = vmatprep.subr.mxu0 0.0
        %466 = vmatpush2.msra.mxu0 0.0
        %467 = vmatprep.subr.mxu0 0.0
        %468 = vmatpush2.msra.mxu0 0.0
        %469 = vmatprep.subr.mxu0 0.0
        %470 = vmatpush2.msra.mxu0 0.0
        %471 = vmatprep.subr.mxu0 0.0
        %472 = vmatpush2.msra.mxu0 0.0
        %473 = vmatprep.subr.mxu0 0.0
        %474 = vmatpush2.msra.mxu0 0.0
        %475 = vmatprep.subr.mxu0 0.0
        %476 = vmatpush2.msra.mxu0 0.0
        %477 = vmatprep.mubr.f32.mxu0 0.0
        %478 = vmatmul.mubr.f32.gmra.mxu0 %v386
        %v479 = vpop.f32.mrf.mxu0
        %v480 = vadd.f32 %v411, %v479
        %v481 = vpop.f32.mrf.mxu0
        %482 = vmatprep.mubr.f32.mxu0 0.0
        %483 = vmatmul.mubr.f32.gmra.mxu0 %v387
        %v484 = vpop.f32.mrf.mxu0
        %v485 = vadd.f32 %v411, %v484
        %v486 = vpop.f32.mrf.mxu0
        %487 = vmatprep.mubr.f32.mxu0 0.0
        %488 = vmatmul.mubr.f32.gmra.mxu0 %v388
        %v489 = vpop.f32.mrf.mxu0
        %v490 = vadd.f32 %v411, %v489
        %v491 = vpop.f32.mrf.mxu0
        %492 = vmatprep.mubr.f32.mxu0 0.0
        %493 = vmatmul.mubr.f32.gmra.mxu0 %v389
        %v494 = vpop.f32.mrf.mxu0
        %v495 = vadd.f32 %v411, %v494
        %v496 = vpop.f32.mrf.mxu0
        %497 = vdwg.mxu0
        %v498 = vlaneseq
        %v499 = vand.u32 %v498, 127
        %vm500 = vcmp.lt.s32.totalorder %v499, 8
        %v501 = vsel %vm500, %v480, -inf
        %v502 = vsel %vm500, %v485, -inf
        %v503 = vsel %vm500, %v490, -inf
        %v504 = vsel %vm500, %v495, -inf
        %505 = vmax.xlane.f32.xlu0 %v501
        %v506 = vpop.xlane.xlu0 %505
        %507 = vmax.xlane.f32.xlu0 %v502
        %v508 = vpop.xlane.xlu0 %507
        %509 = vmax.xlane.f32.xlu0 %v503
        %v510 = vpop.xlane.xlu0 %509
        %511 = vmax.xlane.f32.xlu0 %v504
        %v512 = vpop.xlane.xlu0 %511
        %v513 = vsub.f32 %v501, %v506
        %v514 = vsub.f32 %v502, %v508
        %v515 = vsub.f32 %v503, %v510
        %v516 = vsub.f32 %v504, %v512
        %v517 = vmul.f32 %v513, 1.442695
        %v518 = vpow.pop %v517
        %v519 = vmul.f32 %v514, 1.442695
        %v520 = vpow.pop %v519
        %v521 = vmul.f32 %v515, 1.442695
        %v522 = vpow.pop %v521
        %v523 = vmul.f32 %v516, 1.442695
        %v524 = vpow.pop %v523
        %525 = vadd.xlane.f32.xlu0 %v518
        %v526 = vpop.xlane.xlu0 %525
        %527 = vadd.xlane.f32.xlu0 %v520
        %v528 = vpop.xlane.xlu0 %527
        %529 = vadd.xlane.f32.xlu0 %v522
        %v530 = vpop.xlane.xlu0 %529
        %531 = vadd.xlane.f32.xlu0 %v524
        %v532 = vpop.xlane.xlu0 %531
        %v533 = vlog2.pop %v526
        %v534 = vmul.f32 %v533, 0.6931472
        %v535 = vlog2.pop %v528
        %v536 = vmul.f32 %v535, 0.6931472
        %v537 = vlog2.pop %v530
        %v538 = vmul.f32 %v537, 0.6931472
        %v539 = vlog2.pop %v532
        %v540 = vmul.f32 %v539, 0.6931472
        %v541 = vsub.f32 %v513, %v534
        %v542 = vsub.f32 %v514, %v536
        %v543 = vsub.f32 %v515, %v538
        %v544 = vsub.f32 %v516, %v540
        %545 = vst [vmem:[%s271] sm:$0xff] %v541
        %546 = vst [vmem:[%s271 + $0x8] sm:$0xff] %v542
        %547 = vst [vmem:[%s271 + $0x10] sm:$0xff] %v543
        %548 = vst [vmem:[%s271 + $0x18] sm:$0xff] %v544
        %s549 = sand.u32 %s141, 1
        %s550 = scalar_lea.sflag [#allocation4], %s549
        %s551 = sand.u32 %s141, 1
        %s552 = smul.addr %s551, 32
        %s553 = scalar_lea.vmem [#allocation8], %s552
        // Predicated region
        $region53: #{tpu_custom_call.1} parent=39 // pred_check
          %p554 = pneg %p151
        $region54: #{tpu_custom_call.1} parent=39 // pred_check_branch
          %556 = sbr.rel (%p554) target = $region56
        $region55: #{tpu_custom_call.1} parent=39 // pred_region
          %s557 = smul.u32 4, %s23
          %s559 = ssub.s32 512, 512
          %560 = vsyncadd %s550, %s559
          %s561 = smul.addr %s557, 128
          %s562 = scalar_lea.hbm %s5, %s561
          %s563 = sshll.u32 %s553, 4
          %s564 = int_to_ptr.vmem [resolvable:$true] %s563
          %569 = dma.vmem_to_hbm [thread:$0]  %s564, 512, %s562, %s550, 128, 128, 8
        $region56: #{tpu_custom_call.1} parent=39 // pred_fallthru
          _
      $region40: #{tpu_custom_call.1} parent=5 // pred_fallthru
        _
      %p570 = scmp.le.s32.totalorder 2, %s18
      // Predicated region
      $region57: #{tpu_custom_call.1} parent=5 // pred_check
        %p571 = pneg %p570
      $region58: #{tpu_custom_call.1} parent=5 // pred_check_branch
        %573 = sbr.rel (%p571) target = $region60
      $region59: #{tpu_custom_call.1} parent=5 // pred_region
        %s574 = ssub.s32 %s18, 2
        // Predicated region
        $region61: #{tpu_custom_call.1} parent=59 // pred_check
          %p575 = pneg %p157
        $region62: #{tpu_custom_call.1} parent=59 // pred_check_branch
          %577 = sbr.rel (%p575) target = $region64
        $region63: #{tpu_custom_call.1} parent=59 // pred_region
          %s578 = sand.u32 %s142, 1
          %s579 = scalar_lea.sflag [#allocation4], %s578
          %s580 = sand.u32 %s142, 1
          %s581 = smul.addr %s580, 32
          %s582 = scalar_lea.vmem [#allocation8], %s581
          %583 = dma.done %s579, 512
        $region64: #{tpu_custom_call.1} parent=59 // pred_fallthru
          _
      $region60: #{tpu_custom_call.1} parent=5 // pred_fallthru
        _
    $region6: #{tpu_custom_call.1} parent=1 // loop_footer
      %s22 = sadd.s32 1, %s18
    $region7: #{tpu_custom_call.1} parent=1 // loop_footer_branch
      %17 = sbr.rel target = $region3
    $region8: #{tpu_custom_call.1} parent=1 // loop_exit
      _
    %584 = vsyncpa [#allocation3], 1
    %s585 = scalar_lea.sflag [#allocation3], 1
    %586 = vsyncpa %s585, 1
    %587 = vsyncpa [#allocation6], 1
    %588 = vsyncpa [#allocation4], 1
    %s589 = scalar_lea.sflag [#allocation4], 1
    %590 = vsyncpa %s589, 1

</llo_original>
